<compile_context>
chip_gen: v5e
topology: v5e:2x2
jax: 0.10.0
libtpu: 0.0.40
codegen_flags: <defaults>
</compile_context>

<pallas_src>
import functools
import math

import jax
import jax.numpy as jnp
from jax import lax
from jax.experimental import pallas as pl
from jax.experimental.pallas import tpu as pltpu


def build_positional_encoding_table(max_len: int, d_model: int) -> jnp.ndarray:
    """Sinusoidal table, shape [max_len, d_model] (== PyTorch buffer pe[:, 0, :])."""
    position = jnp.arange(max_len, dtype=jnp.float32)[:, None]                  # [L, 1]
    div_term = jnp.exp(
        jnp.arange(0, d_model, 2, dtype=jnp.float32) * (-math.log(10000.0) / d_model)
    )                                                                            # [D/2]
    pe = jnp.zeros((max_len, d_model), dtype=jnp.float32)
    pe = pe.at[:, 0::2].set(jnp.sin(position * div_term))
    pe = pe.at[:, 1::2].set(jnp.cos(position * div_term))
    return pe


def _sublane_multiple(itemsize: int) -> int:
    # Sub-32-bit dtypes pack along sublanes: f32 -> 8 rows/vreg, bf16 -> 16, int8/fp8 -> 32.
    return max(8, 32 // max(int(itemsize), 1))


def _auto_tile_s(S: int, row_bytes: int, sublane: int,
                 target_block_bytes: int = 4 * 1024 * 1024) -> int:
    """Pick tile_s: sublane-dense, block <= ~4 MiB.  Prefer divisors of S that yield
    an even number of blocks (clean megacore split on v7x), then any divisor (no
    ragged tail), then the raw cap (cdiv grid with a masked tail block)."""
    if S <= sublane:
        return S
    cap = max(sublane, min(S, target_block_bytes // max(row_bytes, 1)))
    cap = (cap // sublane) * sublane
    best_div = None
    for t in range(cap, sublane - 1, -sublane):
        if S % t == 0:
            nb = S // t
            if nb >= 2 and nb % 2 == 0:
                return t
            if best_div is None:
                best_div = t
    return best_div if best_div is not None else cap


def _pos_enc_dropout_kernel(seed_ref, x_ref, pe_ref, o_ref, *,
                            p: float, train: bool, batch: int, tile_s: int):
    # x_ref / o_ref : [tile_s, batch * d_model]  (sublane = tile_s, lane = batch*d_model)
    # pe_ref        : [tile_s, d_model]
    # Widen pe along the lane axis (pe repeated once per batch element) with a single
    # jnp.tile — VMEM-side only, hidden under the HBM-bound DMA.
    pe_wide = jnp.tile(pe_ref[...], (1, batch))
    y = x_ref[...] + pe_wide

    if train and p >= 1.0:
        # torch.nn.Dropout(p=1.0) zeroes everything in train mode.
        o_ref[...] = jnp.zeros_like(o_ref)
        return

    if train and p > 0.0:
        # Stateless counter-based keep mask:
        #   counter = global flat element index (tile-invariant across any tiling)
        #   k       = ((counter + seed_mix) * GOLDEN) ^ (... >> 16)
        # One uint32 multiply + one xor-shift per element (plus the counter's
        # int32 mul/adds), about half the VPU work of the old murmur3 finalizer.
        shape = y.shape
        lanes = shape[1]
        rows = lax.broadcasted_iota(jnp.int32, shape, 0)
        cols = lax.broadcasted_iota(jnp.int32, shape, 1)
        base = pl.program_id(0) * (tile_s * lanes)                 # scalar
        counter = (rows * lanes + cols + base).astype(jnp.uint32)  # single cast
        seed_mix = seed_ref[0].astype(jnp.uint32) * jnp.uint32(0x9E3779B9)  # scalar, once
        k = (counter + seed_mix) * jnp.uint32(0x9E3779B1)          # 1 u32 mul / element
        k = k ^ (k >> 16)
        # Integer-domain keep decision: P(drop) = p; 1/(1-p) scale folded into one where().
        thresh = jnp.uint32(min(int(round(p * 2.0 ** 32)), 2 ** 32 - 1))
        keep = k >= thresh
        y = jnp.where(keep, y * (1.0 / (1.0 - p)), 0.0)

    o_ref[...] = y.astype(o_ref.dtype)


def transformer_positional_encoding(
    x: jnp.ndarray,          # [S, B, D]
    pe: jnp.ndarray,         # [max_len, D]  (full table; NOT sliced in the wrapper)
    *,
    p: float = 0.1,
    train: bool = False,
    seed: int = 0,
    tile_s: int | None = None,
) -> jnp.ndarray:
    S, B, D = x.shape
    if pe.ndim != 2 or pe.shape[1] != D:
        raise ValueError(f"pe must be [max_len, {D}], got {pe.shape}")
    if S > pe.shape[0]:
        raise ValueError(f"seq_len {S} exceeds max_len {pe.shape[0]}")
    if not (0.0 <= p <= 1.0):
        raise ValueError(f"dropout p must be in [0, 1], got {p}")
    if train and 0.0 < p < 1.0 and S * B * D >= 2 ** 32:
        # The tile-invariant uint32 element counter would wrap and reuse mask bits.
        raise ValueError("S*B*D must be < 2**32 for the fused dropout mask")

    # Lane-dense 2-D view; merging trailing dims of a contiguous array is a free bitcast.
    # Fast (unmasked-store) path needs B*D % 128 == 0; other shapes still run, with
    # masked partial stores.
    x2 = x.reshape(S, B * D)

    itemsize = x.dtype.itemsize
    if tile_s is None:
        tile_s = _auto_tile_s(S, B * D * itemsize, _sublane_multiple(itemsize))
    num_blocks = pl.cdiv(S, tile_s)

    seed_arr = jnp.array([seed], dtype=jnp.int32)
    kernel = functools.partial(
        _pos_enc_dropout_kernel, p=float(p), train=bool(train), batch=B, tile_s=tile_s
    )

    out2 = pl.pallas_call(
        kernel,
        out_shape=jax.ShapeDtypeStruct((S, B * D), x.dtype),
        grid_spec=pltpu.PrefetchScalarGridSpec(
            num_scalar_prefetch=1,                     # seed lives in SMEM
            grid=(num_blocks,),
            in_specs=[
                pl.BlockSpec((tile_s, B * D), lambda i, seed: (i, 0)),   # x slab
                pl.BlockSpec((tile_s, D),     lambda i, seed: (i, 0)),   # pe rows
            ],
            out_specs=pl.BlockSpec((tile_s, B * D), lambda i, seed: (i, 0)),
        ),
        compiler_params=pltpu.CompilerParams(
            # Steps are independent (stateless per-element mask) -> Mosaic may shard
            # the grid across TensorCores (v7x megacore); neutral on v5e/v6e.
            dimension_semantics=("parallel",),
            # 4 MiB blocks, double-buffered in+out, plus f32/u32 temporaries: raise
            # the scoped-VMEM limit (v5e default is only 16 MiB).  48 MiB is safe on
            # v5e/v6e (128 MiB physical) and v7x (64 MiB physical).
            vmem_limit_bytes=48 * 1024 * 1024,
        ),
        # Donate x's HBM buffer to the output (x2 is input index 1 after the seed).
        input_output_aliases={1: 0},
    )(seed_arr, x2, pe)

    return out2.reshape(S, B, D)


if __name__ == "__main__":
    d_model = 32
    max_len = 1000
    seq_len = 64
    batch = 4          # batch * d_model = 128 -> lane-dense blocks even at toy size

    key = jax.random.PRNGKey(0)
    x = jax.random.normal(key, (seq_len, batch, d_model), dtype=jnp.float32)
    pe = build_positional_encoding_table(max_len, d_model)
    ref = x + pe[:seq_len][:, None, :]

    # Eval mode (dropout is identity), matching module.eval() semantics.
    out = transformer_positional_encoding(x, pe, p=0.1, train=False)
    out = jax.block_until_ready(out)
    assert out.shape == (seq_len, batch, d_model)
    assert jnp.allclose(out, ref, atol=1e-6), "eval mismatch vs reference"

    # bf16 eval smoke test (exercises the 16-row sublane tiling path).
    x_bf16 = x.astype(jnp.bfloat16)
    out_bf16 = jax.block_until_ready(
        transformer_positional_encoding(x_bf16, pe, p=0.1, train=False)
    )
    ref_bf16 = (x_bf16.astype(jnp.float32) + pe[:seq_len][:, None, :]).astype(jnp.bfloat16)
    assert out_bf16.dtype == jnp.bfloat16
    assert jnp.allclose(out_bf16.astype(jnp.float32), ref_bf16.astype(jnp.float32),
                        atol=1e-2), "bf16 eval mismatch vs reference"

    # Train mode: fused inverted dropout.
    out_tr = jax.block_until_ready(
        transformer_positional_encoding(x, pe, p=0.1, train=True, seed=42)
    )
    assert out_tr.shape == (seq_len, batch, d_model)
    kept = out_tr != 0.0
    # Kept elements must equal (x + pe) / (1 - p); dropped elements are exactly 0.
    assert jnp.allclose(
        jnp.where(kept, out_tr, 0.0),
        jnp.where(kept, ref * (1.0 / (1.0 - 0.1)), 0.0),
        atol=1e-5,
    ), "train-mode kept values mismatch"
    drop_frac = 1.0 - kept.mean()
    assert 0.0 < float(drop_frac) < 0.3, f"implausible dropout fraction {drop_frac}"

    print("KERNEL_OK")
</pallas_src>

<mosaic_0001>
module attributes {stable_mosaic.version = 11 : i64} {
  func.func @_pos_enc_dropout_kernel(%arg0: i32, %arg1: memref<1xi32, #tpu.memory_space<smem>>, %arg2: memref<32x128xf32, #tpu.memory_space<vmem>>, %arg3: memref<32x32xf32, #tpu.memory_space<vmem>>, %arg4: memref<32x128xf32, #tpu.memory_space<vmem>>) attributes {dimension_semantics = [#tpu.dimension_semantics<parallel>], iteration_bounds = array<i64: 2>, scalar_prefetch = 1 : i64, scratch_operands = 0 : i64, tpu.core_type = #tpu.core_type<tc>, window_params = [{transform_indices = @transform_0, window_bounds = array<i64: 32, 128>}, {transform_indices = @transform_1, window_bounds = array<i64: 32, 32>}, {transform_indices = @transform_2, window_bounds = array<i64: 32, 128>}]} {
    %c0 = arith.constant 0 : index
    %c0_0 = arith.constant 0 : index
    %0 = vector.load %arg3[%c0, %c0_0] : memref<32x32xf32, #tpu.memory_space<vmem>>, vector<32x32xf32>
    %1 = tpu.concatenate %0, %0, %0, %0 in 1 : vector<32x32xf32>, vector<32x32xf32>, vector<32x32xf32>, vector<32x32xf32> -> vector<32x128xf32>
    %c0_1 = arith.constant 0 : index
    %c0_2 = arith.constant 0 : index
    %2 = vector.load %arg2[%c0_1, %c0_2] : memref<32x128xf32, #tpu.memory_space<vmem>>, vector<32x128xf32>
    %3 = arith.addf %2, %1 : vector<32x128xf32>
    %c0_3 = arith.constant 0 : index
    %c0_4 = arith.constant 0 : index
    %4 = vector.load %arg4[%c0_3, %c0_4] : memref<32x128xf32, #tpu.memory_space<vmem>>, vector<32x128xf32>
    tpu.vector_store %arg4[%c0_3, %c0_4], %3 {strides = array<i32>} : memref<32x128xf32, #tpu.memory_space<vmem>>, vector<32x128xf32>,
    return
  }
  func.func @transform_0(%arg0: i32, %arg1: memref<1xi32, #tpu.memory_space<smem>>) -> (i32, i32) {
    %c0_i32 = arith.constant 0 : i32
    %c0_i32_0 = arith.constant 0 : i32
    return %arg0, %c0_i32 : i32, i32
  }
  func.func @transform_1(%arg0: i32, %arg1: memref<1xi32, #tpu.memory_space<smem>>) -> (i32, i32) {
    %c0_i32 = arith.constant 0 : i32
    %c0_i32_0 = arith.constant 0 : i32
    return %arg0, %c0_i32 : i32, i32
  }
  func.func @transform_2(%arg0: i32, %arg1: memref<1xi32, #tpu.memory_space<smem>>) -> (i32, i32) {
    %c0_i32 = arith.constant 0 : i32
    %c0_i32_0 = arith.constant 0 : i32
    return %arg0, %c0_i32 : i32, i32
  }
}

</mosaic_0001>

<llo_original>
// kernel: tpu_custom_call.1
$region0: #{tpu_custom_call.1}
  #allocation0 [shape = 'u32[]', space=smem, size = 0x4, offset = 0x4, fixed_abs, tag = 'smem constant byte address 0x4 - core index']
  #allocation1 [shape = 'u32[72,128]{1,0:T(1,128)}', space=vmem, size = 0x9000, scoped, tag = 'internal scratch']
  #allocation2 [shape = 's32[1]{0}', space=sflag, size = 0x4, scoped, tag = 'scoped memory for tpu_custom_call.1']
  #allocation3 [shape = 's32[1]{0:T(128)S(6)}', space=smem, size = 0x200, scoped, tag = 'prefetched SMEM operand 0']
  %s0 = inlined_call_operand.<no memory space> [shape: s32[1], index: 0, kind: input, shape index: {}]
  %s1 = inlined_call_operand.hbm [shape: f32[64,128], index: 1, kind: input, shape index: {}, may-alias: {1,3}]
  %s2 = inlined_call_operand.vmem [shape: f32[1000,32], index: 2, kind: input, shape index: {}]
  %s3 = inlined_call_operand.hbm [shape: f32[64,128], index: 3, kind: output, shape index: {}, may-alias: {1,3}]
  %s4 = sld [smem:[#allocation0]]
  $region45: #{tpu_custom_call.1} parent=0
    _
  %s6 = ssub.s32 1, %s4
  %s7 = scalar_select 0, %s6, %s4
  %8 = sst [smem:[#allocation3]] %s0
  $region1: #{tpu_custom_call.1} parent=0
    #allocation4 [shape = 'u8[32768]{0}', space=vmem, size = 0x8000, scoped, tag = 'input window, operand 1']
    #allocation5 [shape = 's32[2]{0}', space=sflag, size = 0x8, scoped, tag = 'scoped memory for tpu_custom_call.1']
    #allocation6 [shape = 's32[2]{0}', space=sflag, size = 0x8, scoped, tag = 'scoped memory for tpu_custom_call.1']
    #allocation7 [shape = 'u8[32768]{0}', space=vmem, size = 0x8000, scoped, tag = 'output window, operand 0']
    %9 = vsyncpa [#allocation5], 0
    %s10 = scalar_lea.sflag [#allocation5], 1
    %11 = vsyncpa %s10, 0
    %12 = vsyncpa [#allocation6], 0
    %s13 = scalar_lea.sflag [#allocation6], 1
    %14 = vsyncpa %s13, 0
    loop: start=0, step=1, limit=4
    $region2: #{tpu_custom_call.1} parent=1 // loop_pre_header
      _
    $region3: #{tpu_custom_call.1} parent=1 // loop_header
      %s16 = sphi 0, %s20
      %p17 = scmp.ge.s32.totalorder %s16, 4
      %s26 = sphi 0, %s28
      %s29 = sphi 0, %s26
      %s30 = sphi 0, %s29
      %s46 = sphi 0, %s30
      %s52 = sphi 0, %s54
      %s55 = sphi 0, %s52
      %s56 = sphi 0, %s55
      %s72 = sphi 0, %s56
      %s78 = sphi 0, %s80
      %s81 = sphi 0, %s78
      %s82 = sphi 0, %s81
      %s98 = sphi 0, %s82
    $region4: #{tpu_custom_call.1} parent=1 // loop_header_branch
      %19 = sbr.rel (%p17) target = $region8
    $region5: #{tpu_custom_call.1} parent=1 // loop_body
      %s21 = ssub.s32 %s16, 1
      %s22 = ssub.s32 %s16, 2
      %s23 = sadd.s32 %s16, 1
      %s24 = ssub.s32 %s16, %s23
      %p25 = scmp.eq.s32.totalorder %s24, 0
      %s27 = sadd.s32 %s26, 1
      %s28 = scalar_select %p25, %s26, %s27
      %p31 = pneg %p25
      %p32 = scmp.eq.s32.totalorder %s16, 1
      %p33 = por %p31, %p32
      %p34 = scmp.ne.s32.totalorder %s26, %s29
      %p35 = scmp.eq.s32.totalorder %s16, 0
      %p36 = por %p34, %p35
      %p37 = scmp.ne.s32.totalorder %s26, %s29
      %p38 = scmp.eq.s32.totalorder %s21, 1
      %p39 = por %p37, %p38
      %p40 = scmp.ne.s32.totalorder %s29, %s30
      %p41 = scmp.eq.s32.totalorder %s21, 0
      %p42 = por %p40, %p41
      %p43 = scmp.ne.s32.totalorder %s29, %s30
      %p44 = scmp.eq.s32.totalorder %s22, 1
      %p45 = por %p43, %p44
      %p47 = scmp.ne.s32.totalorder %s30, %s46
      %p48 = scmp.eq.s32.totalorder %s22, 0
      %p49 = por %p47, %p48
      %s50 = ssub.s32 %s16, %s23
      %p51 = scmp.eq.s32.totalorder %s50, 0
      %s53 = sadd.s32 %s52, 1
      %s54 = scalar_select %p51, %s52, %s53
      %p57 = pneg %p51
      %p58 = scmp.eq.s32.totalorder %s16, 1
      %p59 = por %p57, %p58
      %p60 = scmp.ne.s32.totalorder %s52, %s55
      %p61 = scmp.eq.s32.totalorder %s16, 0
      %p62 = por %p60, %p61
      %p63 = scmp.ne.s32.totalorder %s52, %s55
      %p64 = scmp.eq.s32.totalorder %s21, 1
      %p65 = por %p63, %p64
      %p66 = scmp.ne.s32.totalorder %s55, %s56
      %p67 = scmp.eq.s32.totalorder %s21, 0
      %p68 = por %p66, %p67
      %p69 = scmp.ne.s32.totalorder %s55, %s56
      %p70 = scmp.eq.s32.totalorder %s22, 1
      %p71 = por %p69, %p70
      %p73 = scmp.ne.s32.totalorder %s56, %s72
      %p74 = scmp.eq.s32.totalorder %s22, 0
      %p75 = por %p73, %p74
      %s76 = ssub.s32 %s16, %s23
      %p77 = scmp.eq.s32.totalorder %s76, 0
      %s79 = sadd.s32 %s78, 1
      %s80 = scalar_select %p77, %s78, %s79
      %p83 = pneg %p77
      %p84 = scmp.eq.s32.totalorder %s16, 1
      %p85 = por %p83, %p84
      %p86 = scmp.ne.s32.totalorder %s78, %s81
      %p87 = scmp.eq.s32.totalorder %s16, 0
      %p88 = por %p86, %p87
      %p89 = scmp.ne.s32.totalorder %s78, %s81
      %p90 = scmp.eq.s32.totalorder %s21, 1
      %p91 = por %p89, %p90
      %p92 = scmp.ne.s32.totalorder %s81, %s82
      %p93 = scmp.eq.s32.totalorder %s21, 0
      %p94 = por %p92, %p93
      %p95 = scmp.ne.s32.totalorder %s81, %s82
      %p96 = scmp.eq.s32.totalorder %s22, 1
      %p97 = por %p95, %p96
      %p99 = scmp.ne.s32.totalorder %s82, %s98
      %p100 = scmp.eq.s32.totalorder %s22, 0
      %p101 = por %p99, %p100
      %p102 = scmp.le.s32.totalorder 1, %s16
      %p103 = scmp.lt.s32.totalorder %s16, 3
      %p104 = pnand %p102, %p103
      %p105 = pneg %p104
      // Predicated region
      $region9: #{tpu_custom_call.1} parent=5 // pred_check
        _
      $region10: #{tpu_custom_call.1} parent=5 // pred_check_branch
        %107 = sbr.rel (%p104) target = $region12
      $region11: #{tpu_custom_call.1} parent=5 // pred_region
        %s108 = ssub.s32 %s16, 1
      $region12: #{tpu_custom_call.1} parent=5 // pred_fallthru
        _
      %p109 = scmp.lt.s32.totalorder %s16, 2
      // Predicated region
      $region13: #{tpu_custom_call.1} parent=5 // pred_check
        %p110 = pneg %p109
      $region14: #{tpu_custom_call.1} parent=5 // pred_check_branch
        %112 = sbr.rel (%p110) target = $region16
      $region15: #{tpu_custom_call.1} parent=5 // pred_region
        // Predicated region
        $region17: #{tpu_custom_call.1} parent=15 // pred_check
          %p113 = pneg %p36
        $region18: #{tpu_custom_call.1} parent=15 // pred_check_branch
          %115 = sbr.rel (%p113) target = $region20
        $region19: #{tpu_custom_call.1} parent=15 // pred_region
          %s116 = sand.u32 %s26, 1
          %s117 = scalar_lea.sflag [#allocation5], %s116
          %s118 = sand.u32 %s26, 1
          %s119 = smul.addr %s118, 32
          %s120 = scalar_lea.vmem [#allocation4], %s119
          %s121 = smul.u32 4, %s16
          %123 = vsyncadd %s117, 0
          %s124 = smul.addr %s121, 8
          %s125 = scalar_lea.hbm %s1, %s124
          %s126 = sshll.u32 %s125, 4
          %s127 = int_to_ptr.hbm [resolvable:$true] %s126
          %s128 = sshll.u32 %s120, 4
          %s129 = int_to_ptr.vmem [resolvable:$true] %s128
          %134 = dma.hbm_to_vmem [thread:$0]  %s127, 512, %s129, %s117, 128, 128, 8
        $region20: #{tpu_custom_call.1} parent=15 // pred_fallthru
          _
        // Predicated region
        $region21: #{tpu_custom_call.1} parent=15 // pred_check
          %p135 = pneg %p62
        $region22: #{tpu_custom_call.1} parent=15 // pred_check_branch
          %137 = sbr.rel (%p135) target = $region24
        $region23: #{tpu_custom_call.1} parent=15 // pred_region
          %s138 = smul.u32 4, %s16
          %s139 = ssub.s32 125, %s138
          %p140 = scmp.lt.s32.totalorder %s139, 4
          %s141 = scalar_select %p140, %s139, 4
          %s142 = smul.u32 8, %s141
          %p143 = scmp.lt.s32.totalorder %s138, 124
          %s144 = scalar_select %p143, %s138, 124
          %s145 = smul.addr %s144, 8
          %s146 = scalar_lea.vmem %s2, %s145
          %s147 = smul.u32 4, %s16
          %s148 = ssub.s32 125, %s147
          %p149 = scmp.lt.s32.totalorder %s148, 4
          %s150 = scalar_select %p149, %s148, 4
          %s151 = smul.u32 8, %s150
        $region24: #{tpu_custom_call.1} parent=15 // pred_fallthru
          _
      $region16: #{tpu_custom_call.1} parent=5 // pred_fallthru
        _
      %p152 = scmp.le.s32.totalorder 1, %s16
      %p153 = scmp.lt.s32.totalorder %s16, 3
      %p154 = pnand %p152, %p153
      %p155 = pneg %p154
      // Predicated region
      $region25: #{tpu_custom_call.1} parent=5 // pred_check
        _
      $region26: #{tpu_custom_call.1} parent=5 // pred_check_branch
        %157 = sbr.rel (%p154) target = $region28
      $region27: #{tpu_custom_call.1} parent=5 // pred_region
        %s158 = ssub.s32 %s16, 1
        %s159 = sand.u32 %s29, 1
        %s160 = scalar_lea.sflag [#allocation5], %s159
        %s161 = sand.u32 %s29, 1
        %s162 = smul.addr %s161, 32
        %s163 = scalar_lea.vmem [#allocation4], %s162
        // Predicated region
        $region29: #{tpu_custom_call.1} parent=27 // pred_check
          %p164 = pneg %p42
        $region30: #{tpu_custom_call.1} parent=27 // pred_check_branch
          %166 = sbr.rel (%p164) target = $region32
        $region31: #{tpu_custom_call.1} parent=27 // pred_region
          %168 = dma.done %s160, 512
        $region32: #{tpu_custom_call.1} parent=27 // pred_fallthru
          _
        %s169 = sand.u32 %s29, 1
        %s170 = scalar_lea.sflag [#allocation5], %s169
        %s171 = sand.u32 %s29, 1
        %s172 = smul.addr %s171, 32
        %s173 = scalar_lea.vmem [#allocation4], %s172
        %p174 = pneg %p42
        %p175 = pneg %p39
        %s176 = smul.u32 4, %s21
        %s177 = ssub.s32 125, %s176
        %p178 = scmp.lt.s32.totalorder %s177, 4
        %s179 = scalar_select %p178, %s177, 4
        %s180 = smul.u32 8, %s179
        %p181 = scmp.lt.s32.totalorder %s176, 124
        %s182 = scalar_select %p181, %s176, 124
        %s183 = smul.addr %s182, 8
        %s184 = scalar_lea.vmem %s2, %s183
        %p185 = pneg %p68
        %p186 = pneg %p65
        %p187 = pneg %p94
        %p188 = pneg %p91
        %s189 = sand.u32 %s81, 1
        %s190 = scalar_lea.sflag [#allocation6], %s189
        %s191 = sand.u32 %s81, 1
        %s192 = smul.addr %s191, 32
        %s193 = scalar_lea.vmem [#allocation7], %s192
        %s194 = smul.u32 4, %s21
        %s195 = smul.u32 4, %s21
        %s196 = ssub.s32 125, %s195
        %p197 = scmp.lt.s32.totalorder %s196, 4
        %s198 = scalar_select %p197, %s196, 4
        %s199 = smul.u32 8, %s198
        %p200 = scmp.lt.s32.totalorder %s195, 124
        %s201 = scalar_select %p200, %s195, 124
        %s202 = smul.addr %s201, 8
        %s203 = scalar_lea.vmem %s2, %s202
        %s204 = smul.u32 4, %s21
        %s205 = ssub.s32 125, %s204
        %p206 = scmp.lt.s32.totalorder %s205, 4
        %s207 = scalar_select %p206, %s205, 4
        %s208 = smul.u32 8, %s207
        %s209 = smul.u32 4, %s21
        %v210 = vld [vmem:[%s203] sm:$0xff]
        %v211 = vld [vmem:[%s203 + $0x8] sm:$0xff]
        %v212 = vld [vmem:[%s203 + $0x10] sm:$0xff]
        %v213 = vld [vmem:[%s203 + $0x18] sm:$0xff]
        %218 = vrot.lane.b32.xlu0 %v210, 32
        %v219 = vpop.permute.xlu0 %218
        %220 = vrot.lane.b32.xlu0 %v211, 32
        %v221 = vpop.permute.xlu0 %220
        %222 = vrot.lane.b32.xlu0 %v212, 32
        %v223 = vpop.permute.xlu0 %222
        %224 = vrot.lane.b32.xlu0 %v213, 32
        %v225 = vpop.permute.xlu0 %224
        %230 = vrot.lane.b32.xlu0 %v210, 64
        %v231 = vpop.permute.xlu0 %230
        %232 = vrot.lane.b32.xlu0 %v211, 64
        %v233 = vpop.permute.xlu0 %232
        %234 = vrot.lane.b32.xlu0 %v212, 64
        %v235 = vpop.permute.xlu0 %234
        %236 = vrot.lane.b32.xlu0 %v213, 64
        %v237 = vpop.permute.xlu0 %236
        %242 = vrot.lane.b32.xlu0 %v210, 96
        %v243 = vpop.permute.xlu0 %242
        %244 = vrot.lane.b32.xlu0 %v211, 96
        %v245 = vpop.permute.xlu0 %244
        %246 = vrot.lane.b32.xlu0 %v212, 96
        %v247 = vpop.permute.xlu0 %246
        %248 = vrot.lane.b32.xlu0 %v213, 96
        %v249 = vpop.permute.xlu0 %248
        %vm254 = vcmask 261120
        %v255 = vsel %vm254, %v210, %v219
        %v256 = vsel %vm254, %v211, %v221
        %v257 = vsel %vm254, %v212, %v223
        %v258 = vsel %vm254, %v213, %v225
        %vm259 = vcmask 523264
        %v260 = vsel %vm259, %v255, %v231
        %v261 = vsel %vm259, %v256, %v233
        %v262 = vsel %vm259, %v257, %v235
        %v263 = vsel %vm259, %v258, %v237
        %vm264 = vcmask 785408
        %v265 = vsel %vm264, %v260, %v243
        %v266 = vsel %vm264, %v261, %v245
        %v267 = vsel %vm264, %v262, %v247
        %v268 = vsel %vm264, %v263, %v249
        %v269 = vld [vmem:[%s163] sm:$0xff]
        %v270 = vld [vmem:[%s163 + $0x8] sm:$0xff]
        %v271 = vld [vmem:[%s163 + $0x10] sm:$0xff]
        %v272 = vld [vmem:[%s163 + $0x18] sm:$0xff]
        %v273 = vadd.f32 %v269, %v265
        %v274 = vadd.f32 %v270, %v266
        %v275 = vadd.f32 %v271, %v267
        %v276 = vadd.f32 %v272, %v268
        %277 = vst [vmem:[%s193] sm:$0xff] %v273
        %278 = vst [vmem:[%s193 + $0x8] sm:$0xff] %v274
        %279 = vst [vmem:[%s193 + $0x10] sm:$0xff] %v275
        %280 = vst [vmem:[%s193 + $0x18] sm:$0xff] %v276
        %s281 = sand.u32 %s81, 1
        %s282 = scalar_lea.sflag [#allocation6], %s281
        %s283 = sand.u32 %s81, 1
        %s284 = smul.addr %s283, 32
        %s285 = scalar_lea.vmem [#allocation7], %s284
        // Predicated region
        $region33: #{tpu_custom_call.1} parent=27 // pred_check
          %p286 = pneg %p91
        $region34: #{tpu_custom_call.1} parent=27 // pred_check_branch
          %288 = sbr.rel (%p286) target = $region36
        $region35: #{tpu_custom_call.1} parent=27 // pred_region
          %s289 = smul.u32 4, %s21
          %291 = vsyncadd %s282, 0
          %s292 = smul.addr %s289, 8
          %s293 = scalar_lea.hbm %s3, %s292
          %s294 = sshll.u32 %s285, 4
          %s295 = int_to_ptr.vmem [resolvable:$true] %s294
          %s296 = sshll.u32 %s293, 4
          %s297 = int_to_ptr.hbm [resolvable:$true] %s296
          %302 = dma.vmem_to_hbm [thread:$0]  %s295, 512, %s297, %s282, 128, 128, 8
        $region36: #{tpu_custom_call.1} parent=27 // pred_fallthru
          _
      $region28: #{tpu_custom_call.1} parent=5 // pred_fallthru
        _
      %p303 = scmp.le.s32.totalorder 2, %s16
      // Predicated region
      $region37: #{tpu_custom_call.1} parent=5 // pred_check
        %p304 = pneg %p303
      $region38: #{tpu_custom_call.1} parent=5 // pred_check_branch
        %306 = sbr.rel (%p304) target = $region40
      $region39: #{tpu_custom_call.1} parent=5 // pred_region
        %s307 = ssub.s32 %s16, 2
        // Predicated region
        $region41: #{tpu_custom_call.1} parent=39 // pred_check
          %p308 = pneg %p97
        $region42: #{tpu_custom_call.1} parent=39 // pred_check_branch
          %310 = sbr.rel (%p308) target = $region44
        $region43: #{tpu_custom_call.1} parent=39 // pred_region
          %s311 = sand.u32 %s82, 1
          %s312 = scalar_lea.sflag [#allocation6], %s311
          %s313 = sand.u32 %s82, 1
          %s314 = smul.addr %s313, 32
          %s315 = scalar_lea.vmem [#allocation7], %s314
          %317 = dma.done %s312, 512
        $region44: #{tpu_custom_call.1} parent=39 // pred_fallthru
          _
      $region40: #{tpu_custom_call.1} parent=5 // pred_fallthru
        _
    $region6: #{tpu_custom_call.1} parent=1 // loop_footer
      %s20 = sadd.s32 1, %s16
    $region7: #{tpu_custom_call.1} parent=1 // loop_footer_branch
      %15 = sbr.rel target = $region3
    $region8: #{tpu_custom_call.1} parent=1 // loop_exit
      _
    %318 = vsyncpa [#allocation5], 1
    %s319 = scalar_lea.sflag [#allocation5], 1
    %320 = vsyncpa %s319, 1
    %321 = vsyncpa [#allocation6], 1
    %s322 = scalar_lea.sflag [#allocation6], 1
    %323 = vsyncpa %s322, 1

</llo_original>
